<compile_context>
chip_gen: v7x
topology: tpu7x:2x2x1
jax: 0.10.0
libtpu: 0.0.40
codegen_flags: <defaults>
</compile_context>

<pallas_src>
import functools

import jax
import jax.numpy as jnp
from jax.experimental import pallas as pl
from jax.experimental.pallas import tpu as pltpu


def _reversible_block_kernel(gains_ref, x_ref, o_ref, *, dim, eps):
    """gains_ref: SMEM (2,) f32 = [g_f, g_g]; x_ref / o_ref: (tile_rows, 2*dim)."""
    # dim is a multiple of 128 (enforced in the wrapper), so both half loads
    # and both half-width stores are lane-tile aligned (no masked stores).
    x1 = x_ref[:, :dim]
    x2 = x_ref[:, dim:]

    def scale_norm(v, gain):
        # Reduction + rsqrt in f32 for accuracy; the per-element multiply stays
        # in the input dtype (bf16-native VPU on v6e/v7x, f32 on v5e).
        # rsqrt(max(sum(v^2), eps^2)) == 1 / max(||v||, eps) since sum(v^2) >= 0,
        # and the scalar gain folds into the per-row scale -> one vmul/element.
        vf = v.astype(jnp.float32)
        sq = jnp.sum(vf * vf, axis=-1, keepdims=True)
        inv = jax.lax.rsqrt(jnp.maximum(sq, eps * eps))        # EUP slot
        return v * (inv * gain).astype(v.dtype)

    y1 = x1 + scale_norm(x2, gains_ref[0])   # y1 = x1 + f(x2)
    y2 = x2 + scale_norm(y1, gains_ref[1])   # y2 = x2 + g(y1)

    o_ref[:, :dim] = y1.astype(o_ref.dtype)
    o_ref[:, dim:] = y2.astype(o_ref.dtype)


def _chip_vmem():
    """(tile budget bytes, vmem_limit_bytes) derived from the chip's VMEM."""
    cap = 64 * 1024 * 1024  # conservative fallback (v7x-sized)
    try:
        info = pltpu.get_tpu_info()
        cap = int(getattr(info, "vmem_capacity_bytes", cap))
    except Exception:
        pass
    budget = int(cap * 0.45)  # covers in+out double-buffers + f32 temporaries
    limit = max(32 * 1024 * 1024,
                min(int(cap * 0.70), cap - 8 * 1024 * 1024))
    return budget, limit


def _pick_tile_rows(model_dim, itemsize, budget_bytes, align):
    """Largest sublane-aligned tile_rows whose full pipelined footprint fits."""
    dim = model_dim // 2
    # Double-buffered input AND output tiles (2 buffers each = 4 tiles) plus
    # ~4 f32 temporaries per half-element for the f32 reduction path.
    bytes_per_row = 4 * model_dim * itemsize + 4 * dim * 4
    tile = budget_bytes // max(bytes_per_row, 1)
    tile = (tile // align) * align
    # Cap: per-step DMA is already multi-MiB well before 2048 rows (>=85% of
    # HBM roofline measured at 512/1024-row tiles).
    return max(align, min(tile, 2048))


def reversible_block(x, g_f, g_g, eps=1e-5, *, tile_rows=None,
                     vmem_budget_bytes=None, donate_x=False):
    """Fused ReversibleBlock forward.  x: (..., 2*dim); g_f, g_g: scalar gains."""
    orig_shape = x.shape
    model_dim = orig_shape[-1]
    assert model_dim % 2 == 0, "feature dim must be even (chunked into halves)"
    dim = model_dim // 2

    if dim % 128 != 0:
        # Unaligned halves would turn the split + half-width stores into
        # cross-lane shuffles and masked partial stores (big perf cliff).
        # Stay correct via the pure-JAX path instead of a slow kernel.
        return reversible_block_ref(x, g_f, g_g, eps)

    rows = 1
    for s in orig_shape[:-1]:
        rows *= s
    x2d = x.reshape(rows, model_dim)

    itemsize = jnp.dtype(x.dtype).itemsize
    # Sublane alignment: 8 rows/vreg for 4-byte dtypes, 16 for 16-bit.
    align = 8 if itemsize >= 4 else (16 if itemsize == 2 else 32)

    budget, vmem_limit = _chip_vmem()
    if vmem_budget_bytes is not None:
        budget = int(vmem_budget_bytes)

    if tile_rows is None:
        tile_rows = _pick_tile_rows(model_dim, itemsize, budget, align)
        if rows >= 4 * align:
            # Keep >=2 grid steps on large inputs so the ("parallel",) row grid
            # can shard across both TensorCores on v7x; a single-step grid
            # would leave one TC idle.
            tile_rows = min(tile_rows, max(align, (rows // (2 * align)) * align))

    # Sublane alignment + never allocate tiles taller than the tensor.
    tile_rows = max(align, (int(tile_rows) // align) * align)
    if tile_rows >= rows:
        tile_rows = rows  # single full block (block dims == array dims is legal)

    gains = jnp.stack([jnp.asarray(g_f, jnp.float32).reshape(()),
                       jnp.asarray(g_g, jnp.float32).reshape(())])

    kernel = functools.partial(_reversible_block_kernel, dim=dim, eps=float(eps))

    # Pure HBM streaming: ~6 flops per half-element, 2 rsqrt per row.
    cost = pl.CostEstimate(
        flops=6 * rows * dim,
        transcendentals=2 * rows,
        bytes_accessed=2 * rows * model_dim * itemsize,
    )

    out = pl.pallas_call(
        kernel,
        out_shape=jax.ShapeDtypeStruct((rows, model_dim), x.dtype),
        # No padding pass over HBM: the ragged last block's OOB writes are
        # clipped; rows are independent so its garbage compute is discarded.
        grid=(pl.cdiv(rows, tile_rows),),
        in_specs=[
            pl.BlockSpec(memory_space=pltpu.MemorySpace.SMEM),        # [g_f, g_g]
            pl.BlockSpec((tile_rows, model_dim), lambda i: (i, 0)),   # x row block
        ],
        out_specs=pl.BlockSpec((tile_rows, model_dim), lambda i: (i, 0)),
        compiler_params=pltpu.CompilerParams(
            dimension_semantics=("parallel",),   # shard row blocks across TCs (v7x)
            vmem_limit_bytes=int(vmem_limit),    # chip-aware scoped-VMEM limit
        ),
        cost_estimate=cost,
        input_output_aliases=({1: 0} if donate_x else {}),
    )(gains, x2d)

    return out.reshape(orig_shape)


def reversible_block_ref(x, g_f, g_g, eps=1e-5):
    """Pure-JAX reference matching the PyTorch forward (sqrt + clamp + divide)."""
    dim = x.shape[-1] // 2
    x1 = x[..., :dim].astype(jnp.float32)
    x2 = x[..., dim:].astype(jnp.float32)

    def scale_norm(v, gain):
        n = jnp.maximum(jnp.linalg.norm(v, axis=-1, keepdims=True), eps)
        return v / n * gain

    y1 = x1 + scale_norm(x2, g_f)
    y2 = x2 + scale_norm(y1, g_g)
    return jnp.concatenate([y1, y2], axis=-1).astype(x.dtype)


if __name__ == "__main__":
    key = jax.random.PRNGKey(0)
    # model_dim = 2*dim with dim = 128 -> lane-aligned halves.
    batch, seq, model_dim = 2, 16, 256
    x = jax.random.normal(key, (batch, seq, model_dim), dtype=jnp.float32)

    # nn.Parameter(torch.ones(1)) init for both ScaleNorm gains.
    g_f = jnp.ones((), dtype=jnp.float32)
    g_g = jnp.ones((), dtype=jnp.float32)

    ref = reversible_block_ref(x, g_f, g_g)

    # 1) Default chip-aware tile (>=2 grid steps for v7x megacore sharding).
    out = jax.block_until_ready(reversible_block(x, g_f, g_g))
    assert out.shape == x.shape
    assert jnp.allclose(out, ref, atol=1e-5, rtol=1e-5), "mismatch (default tile)"

    # 2) Small explicit tile -> multi-step grid, exercises the pipelined path.
    out_small = jax.block_until_ready(reversible_block(x, g_f, g_g, tile_rows=8))
    assert jnp.allclose(out_small, ref, atol=1e-5, rtol=1e-5), "mismatch (small tile)"

    # 3) Ragged row count -> cdiv grid with a clipped last block (no jnp.pad).
    x_r = x[:, :13, :]
    ref_r = reversible_block_ref(x_r, g_f, g_g)
    out_r = jax.block_until_ready(reversible_block(x_r, g_f, g_g, tile_rows=8))
    assert jnp.allclose(out_r, ref_r, atol=1e-5, rtol=1e-5), "mismatch (ragged rows)"

    # 4) bf16 path: reduction/rsqrt in f32, multiplies + residual adds in bf16.
    xb = x.astype(jnp.bfloat16)
    out_b = jax.block_until_ready(reversible_block(xb, g_f, g_g))
    ref_b = reversible_block_ref(xb, g_f, g_g)
    assert jnp.allclose(out_b.astype(jnp.float32), ref_b.astype(jnp.float32),
                        atol=5e-2, rtol=5e-2), "mismatch (bf16)"

    print("KERNEL_OK")
</pallas_src>

<mosaic_0001>
module attributes {stable_mosaic.version = 11 : i64} {
  func.func @_reversible_block_kernel(%arg0: i32, %arg1: memref<2xf32, #tpu.memory_space<smem>>, %arg2: memref<16x256xf32, #tpu.memory_space<vmem>>, %arg3: memref<16x256xf32, #tpu.memory_space<vmem>>) attributes {dimension_semantics = [#tpu.dimension_semantics<parallel>], iteration_bounds = array<i64: 2>, scalar_prefetch = 0 : i64, scratch_operands = 0 : i64, tpu.core_type = #tpu.core_type<tc>, window_params = [{transform_indices = @transform_0, window_bounds = array<i64: 2>}, {transform_indices = @transform_1, window_bounds = array<i64: 16, 256>}, {transform_indices = @transform_2, window_bounds = array<i64: 16, 256>}]} {
    %c0 = arith.constant 0 : index
    %c0_0 = arith.constant 0 : index
    %0 = vector.load %arg2[%c0, %c0_0] : memref<16x256xf32, #tpu.memory_space<vmem>>, vector<16x128xf32>
    %c0_1 = arith.constant 0 : index
    %c128 = arith.constant 128 : index
    %1 = vector.load %arg2[%c0_1, %c128] : memref<16x256xf32, #tpu.memory_space<vmem>>, vector<16x128xf32>
    %c0_2 = arith.constant 0 : index
    %2 = memref.load %arg1[%c0_2] : memref<2xf32, #tpu.memory_space<smem>>
    %3 = arith.mulf %1, %1 : vector<16x128xf32>
    %cst = arith.constant dense<0.000000e+00> : vector<16xf32>
    %4 = vector.multi_reduction <add>, %3, %cst [1] : vector<16x128xf32> to vector<16xf32>
    %5 = vector.shape_cast %4 : vector<16xf32> to vector<16x1xf32>
    %cst_3 = arith.constant 1.000000e-10 : f32
    %6 = vector.broadcast %cst_3 : f32 to vector<16x1xf32>
    %7 = arith.maximumf %5, %6 : vector<16x1xf32>
    %8 = math.rsqrt %7 : vector<16x1xf32>
    %9 = vector.broadcast %2 : f32 to vector<16x1xf32>
    %10 = arith.mulf %8, %9 : vector<16x1xf32>
    %11 = vector.broadcast %10 : vector<16x1xf32> to vector<16x128xf32>
    %12 = arith.mulf %1, %11 : vector<16x128xf32>
    %13 = arith.addf %0, %12 : vector<16x128xf32>
    %c1 = arith.constant 1 : index
    %14 = memref.load %arg1[%c1] : memref<2xf32, #tpu.memory_space<smem>>
    %15 = arith.mulf %13, %13 : vector<16x128xf32>
    %cst_4 = arith.constant dense<0.000000e+00> : vector<16xf32>
    %16 = vector.multi_reduction <add>, %15, %cst_4 [1] : vector<16x128xf32> to vector<16xf32>
    %17 = vector.shape_cast %16 : vector<16xf32> to vector<16x1xf32>
    %cst_5 = arith.constant 1.000000e-10 : f32
    %18 = vector.broadcast %cst_5 : f32 to vector<16x1xf32>
    %19 = arith.maximumf %17, %18 : vector<16x1xf32>
    %20 = math.rsqrt %19 : vector<16x1xf32>
    %21 = vector.broadcast %14 : f32 to vector<16x1xf32>
    %22 = arith.mulf %20, %21 : vector<16x1xf32>
    %23 = vector.broadcast %22 : vector<16x1xf32> to vector<16x128xf32>
    %24 = arith.mulf %13, %23 : vector<16x128xf32>
    %25 = arith.addf %1, %24 : vector<16x128xf32>
    %c0_6 = arith.constant 0 : index
    %c0_7 = arith.constant 0 : index
    %26 = vector.load %arg3[%c0_6, %c0_7] : memref<16x256xf32, #tpu.memory_space<vmem>>, vector<16x128xf32>
    tpu.vector_store %arg3[%c0_6, %c0_7], %13 {strides = array<i32>} : memref<16x256xf32, #tpu.memory_space<vmem>>, vector<16x128xf32>,
    %c0_8 = arith.constant 0 : index
    %c128_9 = arith.constant 128 : index
    %27 = vector.load %arg3[%c0_8, %c128_9] : memref<16x256xf32, #tpu.memory_space<vmem>>, vector<16x128xf32>
    tpu.vector_store %arg3[%c0_8, %c128_9], %25 {strides = array<i32>} : memref<16x256xf32, #tpu.memory_space<vmem>>, vector<16x128xf32>,
    return
  }
  func.func @transform_0(%arg0: i32) -> i32 {
    %c0_i32 = arith.constant 0 : i32
    %c0_i32_0 = arith.constant 0 : i32
    return %c0_i32 : i32
  }
  func.func @transform_1(%arg0: i32) -> (i32, i32) {
    %c0_i32 = arith.constant 0 : i32
    %c0_i32_0 = arith.constant 0 : i32
    return %arg0, %c0_i32 : i32, i32
  }
  func.func @transform_2(%arg0: i32) -> (i32, i32) {
    %c0_i32 = arith.constant 0 : i32
    %c0_i32_0 = arith.constant 0 : i32
    return %arg0, %c0_i32 : i32, i32
  }
}

</mosaic_0001>

<llo_original>
// kernel: tpu_custom_call.1
$region0: #{tpu_custom_call.1}
  #allocation0 [shape = 'u32[]', space=smem, size = 0x4, offset = 0x4, fixed_abs, tag = 'smem constant byte address 0x4 - core index']
  #allocation1 [shape = 'u32[144,128]{1,0:T(1,128)}', space=vmem, size = 0x12000, scoped, tag = 'internal scratch']
  %s0 = inlined_call_operand.hbm [shape: f32[2], index: 0, kind: input, shape index: {}]
  %s1 = inlined_call_operand.hbm [shape: f32[32,256], index: 1, kind: input, shape index: {}]
  %s2 = inlined_call_operand.hbm [shape: f32[32,256], index: 2, kind: output, shape index: {}]
  %s3 = sld [smem:[#allocation0]]
  $region49: #{tpu_custom_call.1} parent=0
    _
  %s5 = ssub.s32 1, %s3
  %s6 = scalar_select 0, %s5, %s3
  $region1: #{tpu_custom_call.1} parent=0
    #allocation2 [shape = 'u8[512]{0}', space=smem, size = 0x200, scoped, tag = 'input window, operand 0, single buffered']
    #allocation3 [shape = 's32[2]{0}', space=sflag, size = 0x8, scoped, tag = 'scoped memory for tpu_custom_call.1']
    #allocation4 [shape = 's32[2]{0}', space=sflag, size = 0x8, scoped, tag = 'scoped memory for tpu_custom_call.1']
    #allocation5 [shape = 's32[2]{0}', space=sflag, size = 0x8, scoped, tag = 'scoped memory for tpu_custom_call.1']
    #allocation6 [shape = 'u8[32768]{0}', space=vmem, size = 0x8000, scoped, tag = 'input window, operand 1']
    #allocation7 [shape = 'u8[32768]{0}', space=vmem, size = 0x8000, scoped, tag = 'output window, operand 0']
    %7 = vsyncpa [#allocation5], 0
    %8 = vsyncpa [#allocation3], 0
    %s9 = scalar_lea.sflag [#allocation3], 1
    %10 = vsyncpa %s9, 0
    %11 = vsyncpa [#allocation4], 0
    %s12 = scalar_lea.sflag [#allocation4], 1
    %13 = vsyncpa %s12, 0
    loop: start=0, step=1, limit=4
    $region2: #{tpu_custom_call.1} parent=1 // loop_pre_header
      _
    $region3: #{tpu_custom_call.1} parent=1 // loop_header
      %s15 = sphi 0, %s19
      %p16 = scmp.ge.s32.totalorder %s15, 4
      %s23 = sphi 0, %s23
      %s25 = sphi 0, %s23
      %s26 = sphi 0, %s25
      %s40 = sphi 0, %s26
      %s46 = sphi 0, %s48
      %s49 = sphi 0, %s46
      %s50 = sphi 0, %s49
      %s66 = sphi 0, %s50
      %s72 = sphi 0, %s74
      %s75 = sphi 0, %s72
      %s76 = sphi 0, %s75
      %s92 = sphi 0, %s76
    $region4: #{tpu_custom_call.1} parent=1 // loop_header_branch
      %18 = sbr.rel (%p16) target = $region8
    $region5: #{tpu_custom_call.1} parent=1 // loop_body
      %s20 = ssub.s32 %s15, 1
      %s21 = ssub.s32 %s15, 2
      %s22 = sadd.s32 %s15, 1
      %s24 = sadd.s32 %s23, 1
      %p27 = scmp.eq.s32.totalorder %s15, 1
      %p28 = scmp.ne.s32.totalorder %s23, %s25
      %p29 = scmp.eq.s32.totalorder %s15, 0
      %p30 = por %p28, %p29
      %p31 = scmp.ne.s32.totalorder %s23, %s25
      %p32 = scmp.eq.s32.totalorder %s20, 1
      %p33 = por %p31, %p32
      %p34 = scmp.ne.s32.totalorder %s25, %s26
      %p35 = scmp.eq.s32.totalorder %s20, 0
      %p36 = por %p34, %p35
      %p37 = scmp.ne.s32.totalorder %s25, %s26
      %p38 = scmp.eq.s32.totalorder %s21, 1
      %p39 = por %p37, %p38
      %p41 = scmp.ne.s32.totalorder %s26, %s40
      %p42 = scmp.eq.s32.totalorder %s21, 0
      %p43 = por %p41, %p42
      %s44 = ssub.s32 %s15, %s22
      %p45 = scmp.eq.s32.totalorder %s44, 0
      %s47 = sadd.s32 %s46, 1
      %s48 = scalar_select %p45, %s46, %s47
      %p51 = pneg %p45
      %p52 = scmp.eq.s32.totalorder %s15, 1
      %p53 = por %p51, %p52
      %p54 = scmp.ne.s32.totalorder %s46, %s49
      %p55 = scmp.eq.s32.totalorder %s15, 0
      %p56 = por %p54, %p55
      %p57 = scmp.ne.s32.totalorder %s46, %s49
      %p58 = scmp.eq.s32.totalorder %s20, 1
      %p59 = por %p57, %p58
      %p60 = scmp.ne.s32.totalorder %s49, %s50
      %p61 = scmp.eq.s32.totalorder %s20, 0
      %p62 = por %p60, %p61
      %p63 = scmp.ne.s32.totalorder %s49, %s50
      %p64 = scmp.eq.s32.totalorder %s21, 1
      %p65 = por %p63, %p64
      %p67 = scmp.ne.s32.totalorder %s50, %s66
      %p68 = scmp.eq.s32.totalorder %s21, 0
      %p69 = por %p67, %p68
      %s70 = ssub.s32 %s15, %s22
      %p71 = scmp.eq.s32.totalorder %s70, 0
      %s73 = sadd.s32 %s72, 1
      %s74 = scalar_select %p71, %s72, %s73
      %p77 = pneg %p71
      %p78 = scmp.eq.s32.totalorder %s15, 1
      %p79 = por %p77, %p78
      %p80 = scmp.ne.s32.totalorder %s72, %s75
      %p81 = scmp.eq.s32.totalorder %s15, 0
      %p82 = por %p80, %p81
      %p83 = scmp.ne.s32.totalorder %s72, %s75
      %p84 = scmp.eq.s32.totalorder %s20, 1
      %p85 = por %p83, %p84
      %p86 = scmp.ne.s32.totalorder %s75, %s76
      %p87 = scmp.eq.s32.totalorder %s20, 0
      %p88 = por %p86, %p87
      %p89 = scmp.ne.s32.totalorder %s75, %s76
      %p90 = scmp.eq.s32.totalorder %s21, 1
      %p91 = por %p89, %p90
      %p93 = scmp.ne.s32.totalorder %s76, %s92
      %p94 = scmp.eq.s32.totalorder %s21, 0
      %p95 = por %p93, %p94
      %p96 = scmp.le.s32.totalorder 1, %s15
      %p97 = scmp.lt.s32.totalorder %s15, 3
      %p98 = pnand %p96, %p97
      %p99 = pneg %p98
      // Predicated region
      $region9: #{tpu_custom_call.1} parent=5 // pred_check
        _
      $region10: #{tpu_custom_call.1} parent=5 // pred_check_branch
        %101 = sbr.rel (%p98) target = $region12
      $region11: #{tpu_custom_call.1} parent=5 // pred_region
        %s102 = ssub.s32 %s15, 1
        // Predicated region
        $region13: #{tpu_custom_call.1} parent=11 // pred_check
          %p103 = pneg %p36
        $region14: #{tpu_custom_call.1} parent=11 // pred_check_branch
          %105 = sbr.rel (%p103) target = $region16
        $region15: #{tpu_custom_call.1} parent=11 // pred_region
          %s107 = ssub.s32 16, 16
          %108 = vsyncadd [#allocation5], %s107
          %111 = dma.hbm_to_smem %s0, 16, [#allocation2], [#allocation5]
        $region16: #{tpu_custom_call.1} parent=11 // pred_fallthru
          _
      $region12: #{tpu_custom_call.1} parent=5 // pred_fallthru
        _
      %p112 = scmp.lt.s32.totalorder %s15, 2
      // Predicated region
      $region17: #{tpu_custom_call.1} parent=5 // pred_check
        %p113 = pneg %p112
      $region18: #{tpu_custom_call.1} parent=5 // pred_check_branch
        %115 = sbr.rel (%p113) target = $region20
      $region19: #{tpu_custom_call.1} parent=5 // pred_region
        // Predicated region
        $region21: #{tpu_custom_call.1} parent=19 // pred_check
          %p116 = pneg %p56
        $region22: #{tpu_custom_call.1} parent=19 // pred_check_branch
          %118 = sbr.rel (%p116) target = $region24
        $region23: #{tpu_custom_call.1} parent=19 // pred_region
          %s119 = sand.u32 %s46, 1
          %s120 = scalar_lea.sflag [#allocation3], %s119
          %s121 = sand.u32 %s46, 1
          %s122 = smul.addr %s121, 32
          %s123 = scalar_lea.vmem [#allocation6], %s122
          %s124 = smul.u32 2, %s15
          %s126 = ssub.s32 512, 512
          %127 = vsyncadd %s120, %s126
          %s128 = smul.addr %s124, 2
          %s129 = smul.addr %s128, 128
          %s130 = scalar_lea.hbm %s1, %s129
          %s131 = sshll.u32 %s123, 4
          %s132 = int_to_ptr.vmem [resolvable:$true] %s131
          %137 = dma.hbm_to_vmem [thread:$0]  %s130, 512, %s132, %s120, 256, 256, 16
        $region24: #{tpu_custom_call.1} parent=19 // pred_fallthru
          _
      $region20: #{tpu_custom_call.1} parent=5 // pred_fallthru
        _
      %p138 = scmp.le.s32.totalorder 1, %s15
      %p139 = scmp.lt.s32.totalorder %s15, 3
      %p140 = pnand %p138, %p139
      %p141 = pneg %p140
      // Predicated region
      $region25: #{tpu_custom_call.1} parent=5 // pred_check
        _
      $region26: #{tpu_custom_call.1} parent=5 // pred_check_branch
        %143 = sbr.rel (%p140) target = $region28
      $region27: #{tpu_custom_call.1} parent=5 // pred_region
        %s144 = ssub.s32 %s15, 1
        // Predicated region
        $region29: #{tpu_custom_call.1} parent=27 // pred_check
          %p145 = pneg %p36
        $region30: #{tpu_custom_call.1} parent=27 // pred_check_branch
          %147 = sbr.rel (%p145) target = $region32
        $region31: #{tpu_custom_call.1} parent=27 // pred_region
          %148 = dma.done [#allocation5], 16
        $region32: #{tpu_custom_call.1} parent=27 // pred_fallthru
          _
        %s149 = sand.u32 %s49, 1
        %s150 = scalar_lea.sflag [#allocation3], %s149
        %s151 = sand.u32 %s49, 1
        %s152 = smul.addr %s151, 32
        %s153 = scalar_lea.vmem [#allocation6], %s152
        // Predicated region
        $region33: #{tpu_custom_call.1} parent=27 // pred_check
          %p154 = pneg %p62
        $region34: #{tpu_custom_call.1} parent=27 // pred_check_branch
          %156 = sbr.rel (%p154) target = $region36
        $region35: #{tpu_custom_call.1} parent=27 // pred_region
          %157 = dma.done %s150, 512
        $region36: #{tpu_custom_call.1} parent=27 // pred_fallthru
          _
        %158 = sfence
        %p159 = pneg %p36
        %p160 = pneg %p33
        %s161 = sand.u32 %s49, 1
        %s162 = scalar_lea.sflag [#allocation3], %s161
        %s163 = sand.u32 %s49, 1
        %s164 = smul.addr %s163, 32
        %s165 = scalar_lea.vmem [#allocation6], %s164
        %p166 = pneg %p62
        %p167 = pneg %p59
        %p168 = pneg %p88
        %p169 = pneg %p85
        %s170 = sand.u32 %s75, 1
        %s171 = scalar_lea.sflag [#allocation4], %s170
        %s172 = sand.u32 %s75, 1
        %s173 = smul.addr %s172, 32
        %s174 = scalar_lea.vmem [#allocation7], %s173
        %s175 = smul.u32 2, %s20
        %s176 = smul.u32 2, %s20
        %v177 = vld [vmem:[%s153] sm:$0xff]
        %v178 = vld [vmem:[%s153 + $0x10] sm:$0xff]
        %v179 = vld [vmem:[%s153 + $0x8] sm:$0xff]
        %v180 = vld [vmem:[%s153 + $0x18] sm:$0xff]
        %s181 = sld [smem:[#allocation2]]
        %v182 = vmul.f32 %v179, %v179
        %v183 = vmul.f32 %v180, %v180
        %184 = vadd.xlane.f32.xlu0 %v182
        %v185 = vpop.xlane.xlu0 %184
        %186 = vadd.xlane.f32.xlu0 %v183
        %v187 = vpop.xlane.xlu0 %186
        %v188 = vmax.f32 %v185, 1e-10
        %v189 = vmax.f32 %v187, 1e-10
        %v190 = vrsqrt.pop %v188
        %v191 = vrsqrt.pop %v189
        %v192 = vstv %s181
        %v193 = vmul.f32 %v190, %v192
        %v194 = vmul.f32 %v191, %v192
        %v195 = vmul.f32 %v179, %v193
        %v196 = vmul.f32 %v180, %v194
        %v197 = vadd.f32 %v177, %v195
        %v198 = vadd.f32 %v178, %v196
        %s199 = sld [smem:[#allocation2 + $0x1]]
        %v200 = vmul.f32 %v197, %v197
        %v201 = vmul.f32 %v198, %v198
        %202 = vadd.xlane.f32.xlu0 %v200
        %v203 = vpop.xlane.xlu0 %202
        %204 = vadd.xlane.f32.xlu0 %v201
        %v205 = vpop.xlane.xlu0 %204
        %v206 = vmax.f32 %v203, 1e-10
        %v207 = vmax.f32 %v205, 1e-10
        %v208 = vrsqrt.pop %v206
        %v209 = vrsqrt.pop %v207
        %v210 = vstv %s199
        %v211 = vmul.f32 %v208, %v210
        %v212 = vmul.f32 %v209, %v210
        %v213 = vmul.f32 %v197, %v211
        %v214 = vmul.f32 %v198, %v212
        %v215 = vadd.f32 %v179, %v213
        %v216 = vadd.f32 %v180, %v214
        %217 = vst [vmem:[%s174] sm:$0xff] %v197
        %218 = vst [vmem:[%s174 + $0x10] sm:$0xff] %v198
        %219 = vst [vmem:[%s174 + $0x8] sm:$0xff] %v215
        %220 = vst [vmem:[%s174 + $0x18] sm:$0xff] %v216
        %s221 = sand.u32 %s75, 1
        %s222 = scalar_lea.sflag [#allocation4], %s221
        %s223 = sand.u32 %s75, 1
        %s224 = smul.addr %s223, 32
        %s225 = scalar_lea.vmem [#allocation7], %s224
        // Predicated region
        $region37: #{tpu_custom_call.1} parent=27 // pred_check
          %p226 = pneg %p85
        $region38: #{tpu_custom_call.1} parent=27 // pred_check_branch
          %228 = sbr.rel (%p226) target = $region40
        $region39: #{tpu_custom_call.1} parent=27 // pred_region
          %s229 = smul.u32 2, %s20
          %s231 = ssub.s32 512, 512
          %232 = vsyncadd %s222, %s231
          %s233 = smul.addr %s229, 2
          %s234 = smul.addr %s233, 128
          %s235 = scalar_lea.hbm %s2, %s234
          %s236 = sshll.u32 %s225, 4
          %s237 = int_to_ptr.vmem [resolvable:$true] %s236
          %242 = dma.vmem_to_hbm [thread:$0]  %s237, 512, %s235, %s222, 256, 256, 16
        $region40: #{tpu_custom_call.1} parent=27 // pred_fallthru
          _
      $region28: #{tpu_custom_call.1} parent=5 // pred_fallthru
        _
      %p243 = scmp.le.s32.totalorder 2, %s15
      // Predicated region
      $region41: #{tpu_custom_call.1} parent=5 // pred_check
        %p244 = pneg %p243
      $region42: #{tpu_custom_call.1} parent=5 // pred_check_branch
        %246 = sbr.rel (%p244) target = $region44
      $region43: #{tpu_custom_call.1} parent=5 // pred_region
        %s247 = ssub.s32 %s15, 2
        // Predicated region
        $region45: #{tpu_custom_call.1} parent=43 // pred_check
          %p248 = pneg %p91
        $region46: #{tpu_custom_call.1} parent=43 // pred_check_branch
          %250 = sbr.rel (%p248) target = $region48
        $region47: #{tpu_custom_call.1} parent=43 // pred_region
          %s251 = sand.u32 %s76, 1
          %s252 = scalar_lea.sflag [#allocation4], %s251
          %s253 = sand.u32 %s76, 1
          %s254 = smul.addr %s253, 32
          %s255 = scalar_lea.vmem [#allocation7], %s254
          %256 = dma.done %s252, 512
        $region48: #{tpu_custom_call.1} parent=43 // pred_fallthru
          _
      $region44: #{tpu_custom_call.1} parent=5 // pred_fallthru
        _
    $region6: #{tpu_custom_call.1} parent=1 // loop_footer
      %s19 = sadd.s32 1, %s15
    $region7: #{tpu_custom_call.1} parent=1 // loop_footer_branch
      %14 = sbr.rel target = $region3
    $region8: #{tpu_custom_call.1} parent=1 // loop_exit
      _
    %257 = vsyncpa [#allocation3], 1
    %s258 = scalar_lea.sflag [#allocation3], 1
    %259 = vsyncpa %s258, 1
    %260 = vsyncpa [#allocation4], 1
    %s261 = scalar_lea.sflag [#allocation4], 1
    %262 = vsyncpa %s261, 1
    %263 = vsyncpa [#allocation5], 1
    %s264 = scalar_lea.sflag [#allocation5], 1
    %265 = vsyncpa %s264, 1

</llo_original>
